<compile_context>
chip_gen: v6e
topology: v6e:2x2x1
jax: 0.10.0
libtpu: 0.0.40
codegen_flags: <defaults>
</compile_context>

<pallas_src>
import functools

import jax
import jax.numpy as jnp
from jax.experimental import pallas as pl
from jax.experimental.pallas import tpu as pltpu


def _soft_argmax_kernel(beta_ref, cmat_ref, rmat_ref, hm_ref, out_ref, *, size_mult):
    """Processes one block of N = N_blk independent (H, W) heatmap slabs.

    hm_ref:   (N, H, W)  heatmap slabs (source dtype; cast to f32 on load)
    beta_ref: (N, 1, 1)  per-slab beta / 49 (avg-pool divisor folded in)
    cmat_ref: (N, W, W)  0/1 band matrix (|i-j| <= 3), pre-broadcast over N
    rmat_ref: (N, H, H)  0/1 band matrix (|i-j| <= 3), pre-broadcast over N
    out_ref:  (N, 2)     [x, y] soft-argmax coordinates per slab
    """
    x = hm_ref[...].astype(jnp.float32)                     # (N, H, W)
    n, h, w = x.shape

    # ---- AvgPool2d(7, stride=1, padding=3, count_include_pad=True) ----------
    # Separable 7x7 box *sum* as two batched band-matrix matmuls on the MXU
    # (the /49 divisor is folded into beta_ref by the wrapper).
    bmm = (((2,), (1,)), ((0,), (0,)))                       # (B,M,K) @ (B,K,N)
    t = jax.lax.dot_general(x, cmat_ref[...], dimension_numbers=bmm,
                            preferred_element_type=jnp.float32)      # cols
    s_box = jax.lax.dot_general(rmat_ref[...], t, dimension_numbers=bmm,
                                preferred_element_type=jnp.float32)  # rows

    # ---- soft-argmax: softmax over spatial positions, normalization deferred -
    beta = beta_ref[...]                                     # (N, 1, 1) == beta/49
    m = jnp.max(jnp.max(s_box, axis=2, keepdims=True), axis=1, keepdims=True)
    e = jnp.exp(beta * (s_box - m))                          # (N, H, W), unnormalized

    e_col = jnp.sum(e, axis=1)                               # (N, W): sum over rows
    e_row = jnp.sum(e, axis=2)                               # (N, H): sum over cols
    denom = jnp.sum(e_col, axis=1, keepdims=True)            # (N, 1)

    col_idx = jax.lax.broadcasted_iota(jnp.int32, (n, w), 1).astype(jnp.float32)
    row_idx = jax.lax.broadcasted_iota(jnp.int32, (n, h), 1).astype(jnp.float32)
    wx = jnp.sum(e_col * col_idx, axis=1, keepdims=True)     # (N, 1)
    wy = jnp.sum(e_row * row_idx, axis=1, keepdims=True)     # (N, 1)

    # Deferred normalization on the tiny (N, 1) results (exact divide);
    # size_mult is folded into the same scale.
    scale = size_mult / (denom + 1e-8)                       # (N, 1)
    out_ref[...] = jnp.concatenate([wx, wy], axis=1) * scale  # (N, 2)


def _band_matrix(n, radius=3):
    idx = jnp.arange(n)
    return (jnp.abs(idx[:, None] - idx[None, :]) <= radius).astype(jnp.float32)


def _choose_block(n_slabs, h, w, in_itemsize, budget_bytes=6 * 1024 * 1024):
    """Pick slabs-per-grid-step: big blocks for DMA efficiency, but sized
    against a conservative VMEM budget (fits v7x's smaller VMEM) and keeping
    >= 2 grid steps so v7x's two TensorCores both get work."""
    # ~6 live f32 (H, W) temporaries + band matrices + double-buffered input.
    per_slab = 4 * (6 * h * w + 3 * (h * h + w * w)) + 4 * h * w * in_itemsize
    cap = max(1, min(n_slabs, budget_bytes // per_slab))
    if n_slabs >= 2:
        cap = min(cap, max(1, n_slabs // 2))
    for nb in range(cap, 0, -1):            # largest divisor -> no padded tail
        if n_slabs % nb == 0:
            return nb
    return 1


def soft_argmax_pavlo(heatmaps, beta, size_mult=1.0):
    """Pallas implementation of SoftArgmaxPavlo.forward.

    heatmaps: (B, C, H, W) float32 (or bfloat16), beta: (C,) float32.
    Returns (B, C, 2) float32 with [..., 0] = x (col), [..., 1] = y (row).
    """
    B, C, H, W = heatmaps.shape
    N = B * C

    # Flatten batch x channel into one slab axis (free reshape in HBM); keep
    # the source dtype -- bf16 inputs are cast to f32 inside the kernel.
    hm = heatmaps.reshape(N, H, W)

    # beta/49 per slab: exp(beta*(S/49 - max/49)) == exp((beta/49)*(S - max)).
    beta_eff = (jnp.broadcast_to(beta.astype(jnp.float32).reshape(1, C), (B, C))
                .reshape(N, 1, 1) * (1.0 / 49.0))

    in_itemsize = jnp.dtype(heatmaps.dtype).itemsize
    n_blk = _choose_block(N, H, W, in_itemsize)
    grid = N // n_blk

    cmat = jnp.broadcast_to(_band_matrix(W), (n_blk, W, W))
    rmat = jnp.broadcast_to(_band_matrix(H), (n_blk, H, H))

    kernel = functools.partial(_soft_argmax_kernel, size_mult=float(size_mult))

    flops = 2 * N * H * W * (H + W) + 10 * N * H * W
    bytes_accessed = (N * H * W * in_itemsize
                      + n_blk * 4 * (H * H + W * W)
                      + N * 2 * 4)

    out = pl.pallas_call(
        kernel,
        out_shape=jax.ShapeDtypeStruct((grid, n_blk, 2), jnp.float32),
        grid=(grid,),
        in_specs=[
            pl.BlockSpec((n_blk, 1, 1), lambda g: (g, 0, 0)),   # beta / 49
            pl.BlockSpec((n_blk, W, W), lambda g: (0, 0, 0)),   # col band matrix
            pl.BlockSpec((n_blk, H, H), lambda g: (0, 0, 0)),   # row band matrix
            pl.BlockSpec((n_blk, H, W), lambda g: (g, 0, 0)),   # heatmap slabs
        ],
        out_specs=pl.BlockSpec((None, n_blk, 2), lambda g: (g, 0, 0)),
        compiler_params=pltpu.CompilerParams(
            dimension_semantics=("parallel",),
            vmem_limit_bytes=32 * 1024 * 1024),
        cost_estimate=pl.CostEstimate(
            flops=int(flops),
            transcendentals=int(N * H * W),
            bytes_accessed=int(bytes_accessed)),
    )(beta_eff, cmat, rmat, hm)

    return out.reshape(B, C, 2)


def _reference(heatmaps, beta, size_mult=1.0):
    """Pure-JAX reference replicating the PyTorch forward semantics."""
    B, C, H, W = heatmaps.shape
    hm = heatmaps.astype(jnp.float32)
    pooled = jax.lax.reduce_window(
        hm, 0.0, jax.lax.add,
        window_dimensions=(1, 1, 7, 7),
        window_strides=(1, 1, 1, 1),
        padding=[(0, 0), (0, 0), (3, 3), (3, 3)]) / 49.0
    flat = pooled.reshape(B, C, -1)
    m = jnp.max(flat, axis=2, keepdims=True)
    e = jnp.exp(beta.reshape(1, C, 1) * (flat - m))
    s = jnp.sum(e, axis=2, keepdims=True)
    norm = (e / (s + 1e-8)).reshape(B, C, H, W)
    col = jnp.arange(W, dtype=jnp.float32) * size_mult
    row = jnp.arange(H, dtype=jnp.float32) * size_mult
    xv = jnp.sum(norm * col[None, None, None, :], axis=(2, 3))
    yv = jnp.sum(norm * row[None, None, :, None], axis=(2, 3))
    return jnp.stack([xv, yv], axis=2)


if __name__ == "__main__":
    key = jax.random.PRNGKey(0)
    B, C, H, W = 2, 4, 16, 16

    heatmaps = jax.random.normal(key, (B, C, H, W), dtype=jnp.float32)
    # SoftArgmaxPavlo(n_keypoints=C, initial_beta=25.0): beta = 25 * ones(C).
    beta = jnp.ones((C,), jnp.float32) * 25.0

    out = soft_argmax_pavlo(heatmaps, beta, size_mult=1.0)
    out = jax.block_until_ready(out)

    assert out.shape == (B, C, 2) and out.dtype == jnp.float32
    ref = _reference(heatmaps, beta, size_mult=1.0)
    assert bool(jnp.allclose(out, ref, rtol=2e-3, atol=2e-3)), "mismatch vs reference"

    print("KERNEL_OK")
</pallas_src>

<mosaic_0001>
module attributes {stable_mosaic.version = 11 : i64} {
  func.func @_soft_argmax_kernel(%arg0: i32, %arg1: memref<4x1x1xf32, #tpu.memory_space<vmem>>, %arg2: memref<4x16x16xf32, #tpu.memory_space<vmem>>, %arg3: memref<4x16x16xf32, #tpu.memory_space<vmem>>, %arg4: memref<4x16x16xf32, #tpu.memory_space<vmem>>, %arg5: memref<1x4x2xf32, #tpu.memory_space<vmem>>) attributes {dimension_semantics = [#tpu.dimension_semantics<parallel>], iteration_bounds = array<i64: 2>, scalar_prefetch = 0 : i64, scratch_operands = 0 : i64, tpu.core_type = #tpu.core_type<tc>, window_params = [{transform_indices = @transform_0, window_bounds = array<i64: 4, 1, 1>}, {pipeline_mode = #tpu.pipeline_mode<synchronous>, transform_indices = @transform_1, window_bounds = array<i64: 4, 16, 16>}, {pipeline_mode = #tpu.pipeline_mode<synchronous>, transform_indices = @transform_2, window_bounds = array<i64: 4, 16, 16>}, {transform_indices = @transform_3, window_bounds = array<i64: 4, 16, 16>}, {transform_indices = @transform_4, window_bounds = array<i64: 1, 4, 2>}]} {
    %c0 = arith.constant 0 : index
    %c0_0 = arith.constant 0 : index
    %c0_1 = arith.constant 0 : index
    %0 = vector.load %arg4[%c0, %c0_0, %c0_1] : memref<4x16x16xf32, #tpu.memory_space<vmem>>, vector<4x16x16xf32>
    %c0_2 = arith.constant 0 : index
    %c0_3 = arith.constant 0 : index
    %c0_4 = arith.constant 0 : index
    %1 = vector.load %arg2[%c0_2, %c0_3, %c0_4] : memref<4x16x16xf32, #tpu.memory_space<vmem>>, vector<4x16x16xf32>
    %cst = arith.constant dense<0.000000e+00> : vector<4x16x16xf32>
    %2 = tpu.matmul %0, %1, %cst {dimension_numbers = #tpu.dot_dimension_numbers<[2], [1], [1], [2], [0, 0, 0, 1, 1, 2], [0], [0]>} : vector<4x16x16xf32>, vector<4x16x16xf32>, vector<4x16x16xf32> -> vector<4x16x16xf32>
    %c0_5 = arith.constant 0 : index
    %c0_6 = arith.constant 0 : index
    %c0_7 = arith.constant 0 : index
    %3 = vector.load %arg3[%c0_5, %c0_6, %c0_7] : memref<4x16x16xf32, #tpu.memory_space<vmem>>, vector<4x16x16xf32>
    %cst_8 = arith.constant dense<0.000000e+00> : vector<4x16x16xf32>
    %4 = tpu.matmul %3, %2, %cst_8 {dimension_numbers = #tpu.dot_dimension_numbers<[2], [1], [1], [2], [0, 0, 0, 1, 1, 2], [0], [0]>} : vector<4x16x16xf32>, vector<4x16x16xf32>, vector<4x16x16xf32> -> vector<4x16x16xf32>
    %c0_9 = arith.constant 0 : index
    %c0_10 = arith.constant 0 : index
    %c0_11 = arith.constant 0 : index
    %5 = vector.load %arg1[%c0_9, %c0_10, %c0_11] : memref<4x1x1xf32, #tpu.memory_space<vmem>>, vector<4x1x1xf32>
    %cst_12 = arith.constant dense<0xFF800000> : vector<4x16xf32>
    %6 = vector.multi_reduction <maximumf>, %4, %cst_12 [2] : vector<4x16x16xf32> to vector<4x16xf32>
    %7 = vector.shape_cast %6 : vector<4x16xf32> to vector<4x16x1xf32>
    %cst_13 = arith.constant dense<0xFF800000> : vector<4x1xf32>
    %8 = vector.multi_reduction <maximumf>, %7, %cst_13 [1] : vector<4x16x1xf32> to vector<4x1xf32>
    %9 = vector.shape_cast %8 : vector<4x1xf32> to vector<4x1x1xf32>
    %10 = vector.broadcast %9 : vector<4x1x1xf32> to vector<4x16x16xf32>
    %11 = arith.subf %4, %10 : vector<4x16x16xf32>
    %12 = vector.broadcast %5 : vector<4x1x1xf32> to vector<4x16x16xf32>
    %13 = arith.mulf %12, %11 : vector<4x16x16xf32>
    %14 = math.exp %13 : vector<4x16x16xf32>
    %cst_14 = arith.constant dense<0.000000e+00> : vector<4x16xf32>
    %15 = vector.multi_reduction <add>, %14, %cst_14 [1] : vector<4x16x16xf32> to vector<4x16xf32>
    %cst_15 = arith.constant dense<0.000000e+00> : vector<4x16xf32>
    %16 = vector.multi_reduction <add>, %14, %cst_15 [2] : vector<4x16x16xf32> to vector<4x16xf32>
    %cst_16 = arith.constant dense<0.000000e+00> : vector<4xf32>
    %17 = vector.multi_reduction <add>, %15, %cst_16 [1] : vector<4x16xf32> to vector<4xf32>
    %18 = vector.shape_cast %17 : vector<4xf32> to vector<4x1xf32>
    %19 = tpu.iota {dimensions = array<i32: 1>} : vector<4x16xi32>
    %20 = arith.sitofp %19 : vector<4x16xi32> to vector<4x16xf32>
    %21 = tpu.iota {dimensions = array<i32: 1>} : vector<4x16xi32>
    %22 = arith.sitofp %21 : vector<4x16xi32> to vector<4x16xf32>
    %23 = arith.mulf %15, %20 : vector<4x16xf32>
    %cst_17 = arith.constant dense<0.000000e+00> : vector<4xf32>
    %24 = vector.multi_reduction <add>, %23, %cst_17 [1] : vector<4x16xf32> to vector<4xf32>
    %25 = vector.shape_cast %24 : vector<4xf32> to vector<4x1xf32>
    %26 = arith.mulf %16, %22 : vector<4x16xf32>
    %cst_18 = arith.constant dense<0.000000e+00> : vector<4xf32>
    %27 = vector.multi_reduction <add>, %26, %cst_18 [1] : vector<4x16xf32> to vector<4xf32>
    %28 = vector.shape_cast %27 : vector<4xf32> to vector<4x1xf32>
    %cst_19 = arith.constant 9.99999993E-9 : f32
    %29 = vector.broadcast %cst_19 : f32 to vector<4x1xf32>
    %30 = arith.addf %18, %29 : vector<4x1xf32>
    %cst_20 = arith.constant 1.000000e+00 : f32
    %31 = vector.broadcast %cst_20 : f32 to vector<4x1xf32>
    %32 = arith.divf %31, %30 : vector<4x1xf32>
    %33 = tpu.concatenate %25, %28 in 1 : vector<4x1xf32>, vector<4x1xf32> -> vector<4x2xf32>
    %34 = vector.broadcast %32 : vector<4x1xf32> to vector<4x2xf32>
    %35 = arith.mulf %33, %34 : vector<4x2xf32>
    %c0_21 = arith.constant 0 : index
    %c0_22 = arith.constant 0 : index
    %c0_23 = arith.constant 0 : index
    %36 = vector.load %arg5[%c0_21, %c0_22, %c0_23] : memref<1x4x2xf32, #tpu.memory_space<vmem>>, vector<1x4x2xf32>
    %37 = vector.shape_cast %36 : vector<1x4x2xf32> to vector<4x2xf32>
    %38 = vector.shape_cast %35 : vector<4x2xf32> to vector<1x4x2xf32>
    tpu.vector_store %arg5[%c0_21, %c0_22, %c0_23], %38 {strides = array<i32>} : memref<1x4x2xf32, #tpu.memory_space<vmem>>, vector<1x4x2xf32>,
    return
  }
  func.func @transform_0(%arg0: i32) -> (i32, i32, i32) {
    %c0_i32 = arith.constant 0 : i32
    %c0_i32_0 = arith.constant 0 : i32
    %c0_i32_1 = arith.constant 0 : i32
    return %arg0, %c0_i32, %c0_i32_0 : i32, i32, i32
  }
  func.func @transform_1(%arg0: i32) -> (i32, i32, i32) {
    %c0_i32 = arith.constant 0 : i32
    %c0_i32_0 = arith.constant 0 : i32
    %c0_i32_1 = arith.constant 0 : i32
    %c0_i32_2 = arith.constant 0 : i32
    return %c0_i32, %c0_i32_0, %c0_i32_1 : i32, i32, i32
  }
  func.func @transform_2(%arg0: i32) -> (i32, i32, i32) {
    %c0_i32 = arith.constant 0 : i32
    %c0_i32_0 = arith.constant 0 : i32
    %c0_i32_1 = arith.constant 0 : i32
    %c0_i32_2 = arith.constant 0 : i32
    return %c0_i32, %c0_i32_0, %c0_i32_1 : i32, i32, i32
  }
  func.func @transform_3(%arg0: i32) -> (i32, i32, i32) {
    %c0_i32 = arith.constant 0 : i32
    %c0_i32_0 = arith.constant 0 : i32
    %c0_i32_1 = arith.constant 0 : i32
    return %arg0, %c0_i32, %c0_i32_0 : i32, i32, i32
  }
  func.func @transform_4(%arg0: i32) -> (i32, i32, i32) {
    %c0_i32 = arith.constant 0 : i32
    %c0_i32_0 = arith.constant 0 : i32
    %c0_i32_1 = arith.constant 0 : i32
    return %arg0, %c0_i32, %c0_i32_0 : i32, i32, i32
  }
}

</mosaic_0001>

<llo_original>
// kernel: tpu_custom_call.1
$region0: #{tpu_custom_call.1}
  #allocation0 [shape = 'u32[]', space=smem, size = 0x4, offset = 0x4, fixed_abs, tag = 'smem constant byte address 0x4 - core index']
  #allocation1 [shape = 'u32[144,128]{1,0:T(1,128)}', space=vmem, size = 0x12000, scoped, tag = 'internal scratch']
  %s0 = inlined_call_operand.vmem [shape: f32[8,1,1], index: 0, kind: input, shape index: {}]
  %s1 = inlined_call_operand.hbm [shape: f32[4,16,16], index: 1, kind: input, shape index: {}]
  %s2 = inlined_call_operand.hbm [shape: f32[4,16,16], index: 2, kind: input, shape index: {}]
  %s3 = inlined_call_operand.hbm [shape: f32[8,16,16], index: 3, kind: input, shape index: {}]
  %s4 = inlined_call_operand.vmem [shape: f32[2,4,2], index: 4, kind: output, shape index: {}]
  %s5 = sld [smem:[#allocation0]]
  $region61: #{tpu_custom_call.1} parent=0
    _
  %s7 = ssub.s32 1, %s5
  %s8 = scalar_select 0, %s7, %s5
  $region1: #{tpu_custom_call.1} parent=0
    #allocation2 [shape = 'u8[32768]{0}', space=vmem, size = 0x8000, scoped, tag = 'input window, operand 1, single buffered']
    #allocation3 [shape = 's32[2]{0}', space=sflag, size = 0x8, scoped, tag = 'scoped memory for tpu_custom_call.1']
    #allocation4 [shape = 'u8[32768]{0}', space=vmem, size = 0x8000, scoped, tag = 'input window, operand 2, single buffered']
    #allocation5 [shape = 's32[1]{0}', space=sflag, size = 0x4, scoped, tag = 'scoped memory for tpu_custom_call.1']
    #allocation6 [shape = 'u8[65536]{0}', space=vmem, size = 0x10000, scoped, tag = 'input window, operand 3']
    %9 = vsyncpa [#allocation3], 0
    %10 = vsyncpa [#allocation5], 0
    loop: start=0, step=1, limit=4
    $region2: #{tpu_custom_call.1} parent=1 // loop_pre_header
      _
    $region3: #{tpu_custom_call.1} parent=1 // loop_header
      %s12 = sphi 0, %s16
      %p13 = scmp.ge.s32.totalorder %s12, 4
      %s22 = sphi 0, %s24
      %s25 = sphi 0, %s22
      %s26 = sphi 0, %s25
      %s42 = sphi 0, %s26
      %s46 = sphi 0, %s46
      %s48 = sphi 0, %s46
      %s49 = sphi 0, %s48
      %s63 = sphi 0, %s49
      %s67 = sphi 0, %s67
      %s69 = sphi 0, %s67
      %s70 = sphi 0, %s69
      %s84 = sphi 0, %s70
      %s90 = sphi 0, %s92
      %s93 = sphi 0, %s90
      %s94 = sphi 0, %s93
      %s110 = sphi 0, %s94
      %s116 = sphi 0, %s118
      %s119 = sphi 0, %s116
      %s120 = sphi 0, %s119
      %s136 = sphi 0, %s120
    $region4: #{tpu_custom_call.1} parent=1 // loop_header_branch
      %15 = sbr.rel (%p13) target = $region8
    $region5: #{tpu_custom_call.1} parent=1 // loop_body
      %s17 = ssub.s32 %s12, 1
      %s18 = ssub.s32 %s12, 2
      %s19 = sadd.s32 %s12, 1
      %s20 = ssub.s32 %s12, %s19
      %p21 = scmp.eq.s32.totalorder %s20, 0
      %s23 = sadd.s32 %s22, 1
      %s24 = scalar_select %p21, %s22, %s23
      %p27 = pneg %p21
      %p28 = scmp.eq.s32.totalorder %s12, 1
      %p29 = por %p27, %p28
      %p30 = scmp.ne.s32.totalorder %s22, %s25
      %p31 = scmp.eq.s32.totalorder %s12, 0
      %p32 = por %p30, %p31
      %p33 = scmp.ne.s32.totalorder %s22, %s25
      %p34 = scmp.eq.s32.totalorder %s17, 1
      %p35 = por %p33, %p34
      %p36 = scmp.ne.s32.totalorder %s25, %s26
      %p37 = scmp.eq.s32.totalorder %s17, 0
      %p38 = por %p36, %p37
      %p39 = scmp.ne.s32.totalorder %s25, %s26
      %p40 = scmp.eq.s32.totalorder %s18, 1
      %p41 = por %p39, %p40
      %p43 = scmp.ne.s32.totalorder %s26, %s42
      %p44 = scmp.eq.s32.totalorder %s18, 0
      %p45 = por %p43, %p44
      %s47 = sadd.s32 %s46, 1
      %p50 = scmp.eq.s32.totalorder %s12, 1
      %p51 = scmp.ne.s32.totalorder %s46, %s48
      %p52 = scmp.eq.s32.totalorder %s12, 0
      %p53 = por %p51, %p52
      %p54 = scmp.ne.s32.totalorder %s46, %s48
      %p55 = scmp.eq.s32.totalorder %s17, 1
      %p56 = por %p54, %p55
      %p57 = scmp.ne.s32.totalorder %s48, %s49
      %p58 = scmp.eq.s32.totalorder %s17, 0
      %p59 = por %p57, %p58
      %p60 = scmp.ne.s32.totalorder %s48, %s49
      %p61 = scmp.eq.s32.totalorder %s18, 1
      %p62 = por %p60, %p61
      %p64 = scmp.ne.s32.totalorder %s49, %s63
      %p65 = scmp.eq.s32.totalorder %s18, 0
      %p66 = por %p64, %p65
      %s68 = sadd.s32 %s67, 1
      %p71 = scmp.eq.s32.totalorder %s12, 1
      %p72 = scmp.ne.s32.totalorder %s67, %s69
      %p73 = scmp.eq.s32.totalorder %s12, 0
      %p74 = por %p72, %p73
      %p75 = scmp.ne.s32.totalorder %s67, %s69
      %p76 = scmp.eq.s32.totalorder %s17, 1
      %p77 = por %p75, %p76
      %p78 = scmp.ne.s32.totalorder %s69, %s70
      %p79 = scmp.eq.s32.totalorder %s17, 0
      %p80 = por %p78, %p79
      %p81 = scmp.ne.s32.totalorder %s69, %s70
      %p82 = scmp.eq.s32.totalorder %s18, 1
      %p83 = por %p81, %p82
      %p85 = scmp.ne.s32.totalorder %s70, %s84
      %p86 = scmp.eq.s32.totalorder %s18, 0
      %p87 = por %p85, %p86
      %s88 = ssub.s32 %s12, %s19
      %p89 = scmp.eq.s32.totalorder %s88, 0
      %s91 = sadd.s32 %s90, 1
      %s92 = scalar_select %p89, %s90, %s91
      %p95 = pneg %p89
      %p96 = scmp.eq.s32.totalorder %s12, 1
      %p97 = por %p95, %p96
      %p98 = scmp.ne.s32.totalorder %s90, %s93
      %p99 = scmp.eq.s32.totalorder %s12, 0
      %p100 = por %p98, %p99
      %p101 = scmp.ne.s32.totalorder %s90, %s93
      %p102 = scmp.eq.s32.totalorder %s17, 1
      %p103 = por %p101, %p102
      %p104 = scmp.ne.s32.totalorder %s93, %s94
      %p105 = scmp.eq.s32.totalorder %s17, 0
      %p106 = por %p104, %p105
      %p107 = scmp.ne.s32.totalorder %s93, %s94
      %p108 = scmp.eq.s32.totalorder %s18, 1
      %p109 = por %p107, %p108
      %p111 = scmp.ne.s32.totalorder %s94, %s110
      %p112 = scmp.eq.s32.totalorder %s18, 0
      %p113 = por %p111, %p112
      %s114 = ssub.s32 %s12, %s19
      %p115 = scmp.eq.s32.totalorder %s114, 0
      %s117 = sadd.s32 %s116, 1
      %s118 = scalar_select %p115, %s116, %s117
      %p121 = pneg %p115
      %p122 = scmp.eq.s32.totalorder %s12, 1
      %p123 = por %p121, %p122
      %p124 = scmp.ne.s32.totalorder %s116, %s119
      %p125 = scmp.eq.s32.totalorder %s12, 0
      %p126 = por %p124, %p125
      %p127 = scmp.ne.s32.totalorder %s116, %s119
      %p128 = scmp.eq.s32.totalorder %s17, 1
      %p129 = por %p127, %p128
      %p130 = scmp.ne.s32.totalorder %s119, %s120
      %p131 = scmp.eq.s32.totalorder %s17, 0
      %p132 = por %p130, %p131
      %p133 = scmp.ne.s32.totalorder %s119, %s120
      %p134 = scmp.eq.s32.totalorder %s18, 1
      %p135 = por %p133, %p134
      %p137 = scmp.ne.s32.totalorder %s120, %s136
      %p138 = scmp.eq.s32.totalorder %s18, 0
      %p139 = por %p137, %p138
      %p140 = scmp.le.s32.totalorder 1, %s12
      %p141 = scmp.lt.s32.totalorder %s12, 3
      %p142 = pnand %p140, %p141
      %p143 = pneg %p142
      // Predicated region
      $region9: #{tpu_custom_call.1} parent=5 // pred_check
        _
      $region10: #{tpu_custom_call.1} parent=5 // pred_check_branch
        %145 = sbr.rel (%p142) target = $region12
      $region11: #{tpu_custom_call.1} parent=5 // pred_region
        %s146 = ssub.s32 %s12, 1
        // Predicated region
        $region13: #{tpu_custom_call.1} parent=11 // pred_check
          %p147 = pneg %p59
        $region14: #{tpu_custom_call.1} parent=11 // pred_check_branch
          %149 = sbr.rel (%p147) target = $region16
        $region15: #{tpu_custom_call.1} parent=11 // pred_region
          %s151 = ssub.s32 1024, 1024
          %152 = vsyncadd [#allocation3], %s151
          %s153 = sshll.u32 [#allocation2], 4
          %s154 = int_to_ptr.vmem [resolvable:$true] %s153
          %159 = dma.hbm_to_vmem [thread:$0]  %s1, 1024, %s154, [#allocation3], 128, 128, 8
        $region16: #{tpu_custom_call.1} parent=11 // pred_fallthru
          _
        // Predicated region
        $region17: #{tpu_custom_call.1} parent=11 // pred_check
          %p160 = pneg %p80
        $region18: #{tpu_custom_call.1} parent=11 // pred_check_branch
          %162 = sbr.rel (%p160) target = $region20
        $region19: #{tpu_custom_call.1} parent=11 // pred_region
          %s164 = ssub.s32 1024, 1024
          %165 = vsyncadd [#allocation5], %s164
          %s166 = sshll.u32 [#allocation4], 4
          %s167 = int_to_ptr.vmem [resolvable:$true] %s166
          %172 = dma.hbm_to_vmem [thread:$0]  %s2, 1024, %s167, [#allocation5], 128, 128, 8
        $region20: #{tpu_custom_call.1} parent=11 // pred_fallthru
          _
      $region12: #{tpu_custom_call.1} parent=5 // pred_fallthru
        _
      %p173 = scmp.lt.s32.totalorder %s12, 2
      // Predicated region
      $region21: #{tpu_custom_call.1} parent=5 // pred_check
        %p174 = pneg %p173
      $region22: #{tpu_custom_call.1} parent=5 // pred_check_branch
        %176 = sbr.rel (%p174) target = $region24
      $region23: #{tpu_custom_call.1} parent=5 // pred_region
        // Predicated region
        $region25: #{tpu_custom_call.1} parent=23 // pred_check
          %p177 = pneg %p32
        $region26: #{tpu_custom_call.1} parent=23 // pred_check_branch
          %179 = sbr.rel (%p177) target = $region28
        $region27: #{tpu_custom_call.1} parent=23 // pred_region
          %s180 = smul.u32 4, %s12
          %p181 = scmp.lt.s32.totalorder %s180, 7
          %s182 = scalar_select %p181, %s180, 7
          %s183 = scalar_lea.vmem %s0, %s182
          %s184 = smul.u32 4, %s12
        $region28: #{tpu_custom_call.1} parent=23 // pred_fallthru
          _
        // Predicated region
        $region29: #{tpu_custom_call.1} parent=23 // pred_check
          %p185 = pneg %p100
        $region30: #{tpu_custom_call.1} parent=23 // pred_check_branch
          %187 = sbr.rel (%p185) target = $region32
        $region31: #{tpu_custom_call.1} parent=23 // pred_region
          %s188 = sand.u32 %s12, 1
          %s189 = scalar_lea.sflag [#allocation3], %s188
          %s190 = sand.u32 %s90, 1
          %s191 = smul.addr %s190, 64
          %s192 = scalar_lea.vmem [#allocation6], %s191
          %s193 = smul.u32 4, %s12
          %s195 = ssub.s32 1024, 1024
          %196 = vsyncadd %s189, %s195
          %s197 = smul.addr %s193, 2
          %s198 = smul.addr %s197, 128
          %s199 = scalar_lea.hbm %s3, %s198
          %s200 = sshll.u32 %s192, 4
          %s201 = int_to_ptr.vmem [resolvable:$true] %s200
          %206 = dma.hbm_to_vmem [thread:$0]  %s199, 1024, %s201, %s189, 128, 128, 8
        $region32: #{tpu_custom_call.1} parent=23 // pred_fallthru
          _
      $region24: #{tpu_custom_call.1} parent=5 // pred_fallthru
        _
      %p207 = scmp.le.s32.totalorder 1, %s12
      %p208 = scmp.lt.s32.totalorder %s12, 3
      %p209 = pnand %p207, %p208
      %p210 = pneg %p209
      // Predicated region
      $region33: #{tpu_custom_call.1} parent=5 // pred_check
        _
      $region34: #{tpu_custom_call.1} parent=5 // pred_check_branch
        %212 = sbr.rel (%p209) target = $region36
      $region35: #{tpu_custom_call.1} parent=5 // pred_region
        %s213 = ssub.s32 %s12, 1
        // Predicated region
        $region37: #{tpu_custom_call.1} parent=35 // pred_check
          %p214 = pneg %p59
        $region38: #{tpu_custom_call.1} parent=35 // pred_check_branch
          %216 = sbr.rel (%p214) target = $region40
        $region39: #{tpu_custom_call.1} parent=35 // pred_region
          %217 = dma.done [#allocation3], 1024
        $region40: #{tpu_custom_call.1} parent=35 // pred_fallthru
          _
        // Predicated region
        $region41: #{tpu_custom_call.1} parent=35 // pred_check
          %p218 = pneg %p80
        $region42: #{tpu_custom_call.1} parent=35 // pred_check_branch
          %220 = sbr.rel (%p218) target = $region44
        $region43: #{tpu_custom_call.1} parent=35 // pred_region
          %221 = dma.done [#allocation5], 1024
        $region44: #{tpu_custom_call.1} parent=35 // pred_fallthru
          _
        %s222 = sand.u32 %s17, 1
        %s223 = scalar_lea.sflag [#allocation3], %s222
        %s224 = sand.u32 %s93, 1
        %s225 = smul.addr %s224, 64
        %s226 = scalar_lea.vmem [#allocation6], %s225
        // Predicated region
        $region45: #{tpu_custom_call.1} parent=35 // pred_check
          %p227 = pneg %p106
        $region46: #{tpu_custom_call.1} parent=35 // pred_check_branch
          %229 = sbr.rel (%p227) target = $region48
        $region47: #{tpu_custom_call.1} parent=35 // pred_region
          %230 = dma.done %s223, 1024
        $region48: #{tpu_custom_call.1} parent=35 // pred_fallthru
          _
        %s231 = smul.u32 4, %s17
        %p232 = scmp.lt.s32.totalorder %s231, 7
        %s233 = scalar_select %p232, %s231, 7
        %s234 = scalar_lea.vmem %s0, %s233
        %p235 = pneg %p38
        %p236 = pneg %p35
        %p237 = pneg %p59
        %p238 = pneg %p56
        %p239 = pneg %p80
        %p240 = pneg %p77
        %s241 = sand.u32 %s17, 1
        %s242 = scalar_lea.sflag [#allocation3], %s241
        %s243 = sand.u32 %s93, 1
        %s244 = smul.addr %s243, 64
        %s245 = scalar_lea.vmem [#allocation6], %s244
        %p246 = pneg %p106
        %p247 = pneg %p103
        %p248 = pneg %p132
        %p249 = pneg %p129
        %p250 = scmp.lt.s32.totalorder %s17, 1
        %s251 = scalar_select %p250, %s17, 1
        %s252 = smul.addr %s251, 4
        %s253 = scalar_lea.vmem %s4, %s252
        %s254 = smul.u32 4, %s17
        %p255 = scmp.lt.s32.totalorder %s254, 7
        %s256 = scalar_select %p255, %s254, 7
        %s257 = scalar_lea.vmem %s0, %s256
        %s258 = smul.u32 4, %s17
        %s259 = smul.u32 4, %s17
        %p260 = scmp.lt.s32.totalorder %s17, 1
        %s261 = scalar_select %p260, %s17, 1
        %s262 = smul.addr %s261, 4
        %s263 = scalar_lea.vmem %s4, %s262
        %v264 = vld [vmem:[%s226] sm:$0xff]
        %v265 = vld [vmem:[%s226 + $0x8] sm:$0xff]
        %v266 = vld [vmem:[%s226 + $0x10] sm:$0xff]
        %v267 = vld [vmem:[%s226 + $0x18] sm:$0xff]
        %v268 = vld [vmem:[%s226 + $0x20] sm:$0xff]
        %v269 = vld [vmem:[%s226 + $0x28] sm:$0xff]
        %v270 = vld [vmem:[%s226 + $0x30] sm:$0xff]
        %v271 = vld [vmem:[%s226 + $0x38] sm:$0xff]
        %v272 = vld [vmem:[#allocation2] sm:$0xff]
        %v273 = vld [vmem:[#allocation2 + $0x8] sm:$0xff]
        %v274 = vld [vmem:[#allocation2 + $0x10] sm:$0xff]
        %v275 = vld [vmem:[#allocation2 + $0x18] sm:$0xff]
        %v276 = vld [vmem:[#allocation2 + $0x20] sm:$0xff]
        %v277 = vld [vmem:[#allocation2 + $0x28] sm:$0xff]
        %v278 = vld [vmem:[#allocation2 + $0x30] sm:$0xff]
        %v279 = vld [vmem:[#allocation2 + $0x38] sm:$0xff]
        %vm280 = vcmask 130048
        %v282 = vsel %vm280, %v264, 0
        %v285 = vsel %vm280, %v265, 0
        %287 = vmatprep.subr.mxu0 0.0
        %288 = vmatpush1.msra.mxu0 0.0
        %289 = vmatprep.subr.mxu0 0.0
        %290 = vmatpush1.msra.mxu0 0.0
        %291 = vmatprep.subr.mxu0 0.0
        %292 = vmatpush1.msra.mxu0 0.0
        %293 = vmatprep.subr.mxu0 0.0
        %294 = vmatpush1.msra.mxu0 0.0
        %295 = vmatprep.subr.mxu0 0.0
        %296 = vmatpush1.msra.mxu0 0.0
        %297 = vmatprep.subr.mxu0 0.0
        %298 = vmatpush1.msra.mxu0 0.0
        %299 = vmatprep.subr.mxu0 0.0
        %300 = vmatpush1.msra.mxu0 0.0
        %301 = vmatprep.subr.mxu0 0.0
        %302 = vmatpush1.msra.mxu0 0.0
        %303 = vmatprep.subr.mxu0 0.0
        %304 = vmatpush1.msra.mxu0 0.0
        %305 = vmatprep.subr.mxu0 0.0
        %306 = vmatpush1.msra.mxu0 0.0
        %307 = vmatprep.subr.mxu0 0.0
        %308 = vmatpush1.msra.mxu0 0.0
        %309 = vmatprep.subr.mxu0 0.0
        %310 = vmatpush1.msra.mxu0 0.0
        %311 = vmatprep.subr.mxu0 0.0
        %312 = vmatpush1.msra.mxu0 0.0
        %313 = vmatprep.subr.mxu0 0.0
        %314 = vmatpush1.msra.mxu0 0.0
        %315 = vmatprep.subr.mxu0 0.0
        %316 = vmatpush1.msra.mxu0 %v273
        %317 = vmatprep.subr.mxu0 0.0
        %318 = vmatpush1.msra.mxu0 %v272
        %319 = vmatprep.subr.mxu0 0.0
        %320 = vmatpush2.msra.mxu0 0.0
        %321 = vmatprep.subr.mxu0 0.0
        %322 = vmatpush2.msra.mxu0 0.0
        %323 = vmatprep.subr.mxu0 0.0
        %324 = vmatpush2.msra.mxu0 0.0
        %325 = vmatprep.subr.mxu0 0.0
        %326 = vmatpush2.msra.mxu0 0.0
        %327 = vmatprep.subr.mxu0 0.0
        %328 = vmatpush2.msra.mxu0 0.0
        %329 = vmatprep.subr.mxu0 0.0
        %330 = vmatpush2.msra.mxu0 0.0
        %331 = vmatprep.subr.mxu0 0.0
        %332 = vmatpush2.msra.mxu0 0.0
        %333 = vmatprep.subr.mxu0 0.0
        %334 = vmatpush2.msra.mxu0 0.0
        %335 = vmatprep.subr.mxu0 0.0
        %336 = vmatpush2.msra.mxu0 0.0
        %337 = vmatprep.subr.mxu0 0.0
        %338 = vmatpush2.msra.mxu0 0.0
        %339 = vmatprep.subr.mxu0 0.0
        %340 = vmatpush2.msra.mxu0 0.0
        %341 = vmatprep.subr.mxu0 0.0
        %342 = vmatpush2.msra.mxu0 0.0
        %343 = vmatprep.subr.mxu0 0.0
        %344 = vmatpush2.msra.mxu0 0.0
        %345 = vmatprep.subr.mxu0 0.0
        %346 = vmatpush2.msra.mxu0 0.0
        %347 = vmatprep.subr.mxu0 0.0
        %348 = vmatpush2.msra.mxu0 0.0
        %349 = vmatprep.subr.mxu0 0.0
        %350 = vmatpush2.msra.mxu0 0.0
        %351 = vmatprep.mubr.f32.mxu0 0.0
        %352 = vmatmul.mubr.f32.gmra.mxu0 %v282
        %v353 = vpop.f32.mrf.mxu0
        %v354 = vadd.f32 0.0, %v353
        %v355 = vpop.f32.mrf.mxu0
        %356 = vmatprep.mubr.f32.mxu0 0.0
        %357 = vmatmul.mubr.f32.gmra.mxu0 %v285
        %v358 = vpop.f32.mrf.mxu0
        %v359 = vadd.f32 0.0, %v358
        %v360 = vpop.f32.mrf.mxu0
        %361 = vdwg.mxu0
        %v363 = vsel %vm280, %v266, 0
        %v366 = vsel %vm280, %v267, 0
        %368 = vmatprep.subr.mxu0 0.0
        %369 = vmatpush1.msra.mxu0 0.0
        %370 = vmatprep.subr.mxu0 0.0
        %371 = vmatpush1.msra.mxu0 0.0
        %372 = vmatprep.subr.mxu0 0.0
        %373 = vmatpush1.msra.mxu0 0.0
        %374 = vmatprep.subr.mxu0 0.0
        %375 = vmatpush1.msra.mxu0 0.0
        %376 = vmatprep.subr.mxu0 0.0
        %377 = vmatpush1.msra.mxu0 0.0
        %378 = vmatprep.subr.mxu0 0.0
        %379 = vmatpush1.msra.mxu0 0.0
        %380 = vmatprep.subr.mxu0 0.0
        %381 = vmatpush1.msra.mxu0 0.0
        %382 = vmatprep.subr.mxu0 0.0
        %383 = vmatpush1.msra.mxu0 0.0
        %384 = vmatprep.subr.mxu0 0.0
        %385 = vmatpush1.msra.mxu0 0.0
        %386 = vmatprep.subr.mxu0 0.0
        %387 = vmatpush1.msra.mxu0 0.0
        %388 = vmatprep.subr.mxu0 0.0
        %389 = vmatpush1.msra.mxu0 0.0
        %390 = vmatprep.subr.mxu0 0.0
        %391 = vmatpush1.msra.mxu0 0.0
        %392 = vmatprep.subr.mxu0 0.0
        %393 = vmatpush1.msra.mxu0 0.0
        %394 = vmatprep.subr.mxu0 0.0
        %395 = vmatpush1.msra.mxu0 0.0
        %396 = vmatprep.subr.mxu0 0.0
        %397 = vmatpush1.msra.mxu0 %v275
        %398 = vmatprep.subr.mxu0 0.0
        %399 = vmatpush1.msra.mxu0 %v274
        %400 = vmatprep.subr.mxu0 0.0
        %401 = vmatpush2.msra.mxu0 0.0
        %402 = vmatprep.subr.mxu0 0.0
        %403 = vmatpush2.msra.mxu0 0.0
        %404 = vmatprep.subr.mxu0 0.0
        %405 = vmatpush2.msra.mxu0 0.0
        %406 = vmatprep.subr.mxu0 0.0
        %407 = vmatpush2.msra.mxu0 0.0
        %408 = vmatprep.subr.mxu0 0.0
        %409 = vmatpush2.msra.mxu0 0.0
        %410 = vmatprep.subr.mxu0 0.0
        %411 = vmatpush2.msra.mxu0 0.0
        %412 = vmatprep.subr.mxu0 0.0
        %413 = vmatpush2.msra.mxu0 0.0
        %414 = vmatprep.subr.mxu0 0.0
        %415 = vmatpush2.msra.mxu0 0.0
        %416 = vmatprep.subr.mxu0 0.0
        %417 = vmatpush2.msra.mxu0 0.0
        %418 = vmatprep.subr.mxu0 0.0
        %419 = vmatpush2.msra.mxu0 0.0
        %420 = vmatprep.subr.mxu0 0.0
        %421 = vmatpush2.msra.mxu0 0.0
        %422 = vmatprep.subr.mxu0 0.0
        %423 = vmatpush2.msra.mxu0 0.0
        %424 = vmatprep.subr.mxu0 0.0
        %425 = vmatpush2.msra.mxu0 0.0
        %426 = vmatprep.subr.mxu0 0.0
        %427 = vmatpush2.msra.mxu0 0.0
        %428 = vmatprep.subr.mxu0 0.0
        %429 = vmatpush2.msra.mxu0 0.0
        %430 = vmatprep.subr.mxu0 0.0
        %431 = vmatpush2.msra.mxu0 0.0
        %432 = vmatprep.mubr.f32.mxu0 0.0
        %433 = vmatmul.mubr.f32.gmra.mxu0 %v363
        %v434 = vpop.f32.mrf.mxu0
        %v435 = vadd.f32 0.0, %v434
        %v436 = vpop.f32.mrf.mxu0
        %437 = vmatprep.mubr.f32.mxu0 0.0
        %438 = vmatmul.mubr.f32.gmra.mxu0 %v366
        %v439 = vpop.f32.mrf.mxu0
        %v440 = vadd.f32 0.0, %v439
        %v441 = vpop.f32.mrf.mxu0
        %442 = vdwg.mxu0
        %v444 = vsel %vm280, %v268, 0
        %v447 = vsel %vm280, %v269, 0
        %449 = vmatprep.subr.mxu0 0.0
        %450 = vmatpush1.msra.mxu0 0.0
        %451 = vmatprep.subr.mxu0 0.0
        %452 = vmatpush1.msra.mxu0 0.0
        %453 = vmatprep.subr.mxu0 0.0
        %454 = vmatpush1.msra.mxu0 0.0
        %455 = vmatprep.subr.mxu0 0.0
        %456 = vmatpush1.msra.mxu0 0.0
        %457 = vmatprep.subr.mxu0 0.0
        %458 = vmatpush1.msra.mxu0 0.0
        %459 = vmatprep.subr.mxu0 0.0
        %460 = vmatpush1.msra.mxu0 0.0
        %461 = vmatprep.subr.mxu0 0.0
        %462 = vmatpush1.msra.mxu0 0.0
        %463 = vmatprep.subr.mxu0 0.0
        %464 = vmatpush1.msra.mxu0 0.0
        %465 = vmatprep.subr.mxu0 0.0
        %466 = vmatpush1.msra.mxu0 0.0
        %467 = vmatprep.subr.mxu0 0.0
        %468 = vmatpush1.msra.mxu0 0.0
        %469 = vmatprep.subr.mxu0 0.0
        %470 = vmatpush1.msra.mxu0 0.0
        %471 = vmatprep.subr.mxu0 0.0
        %472 = vmatpush1.msra.mxu0 0.0
        %473 = vmatprep.subr.mxu0 0.0
        %474 = vmatpush1.msra.mxu0 0.0
        %475 = vmatprep.subr.mxu0 0.0
        %476 = vmatpush1.msra.mxu0 0.0
        %477 = vmatprep.subr.mxu0 0.0
        %478 = vmatpush1.msra.mxu0 %v277
        %479 = vmatprep.subr.mxu0 0.0
        %480 = vmatpush1.msra.mxu0 %v276
        %481 = vmatprep.subr.mxu0 0.0
        %482 = vmatpush2.msra.mxu0 0.0
        %483 = vmatprep.subr.mxu0 0.0
        %484 = vmatpush2.msra.mxu0 0.0
        %485 = vmatprep.subr.mxu0 0.0
        %486 = vmatpush2.msra.mxu0 0.0
        %487 = vmatprep.subr.mxu0 0.0
        %488 = vmatpush2.msra.mxu0 0.0
        %489 = vmatprep.subr.mxu0 0.0
        %490 = vmatpush2.msra.mxu0 0.0
        %491 = vmatprep.subr.mxu0 0.0
        %492 = vmatpush2.msra.mxu0 0.0
        %493 = vmatprep.subr.mxu0 0.0
        %494 = vmatpush2.msra.mxu0 0.0
        %495 = vmatprep.subr.mxu0 0.0
        %496 = vmatpush2.msra.mxu0 0.0
        %497 = vmatprep.subr.mxu0 0.0
        %498 = vmatpush2.msra.mxu0 0.0
        %499 = vmatprep.subr.mxu0 0.0
        %500 = vmatpush2.msra.mxu0 0.0
        %501 = vmatprep.subr.mxu0 0.0
        %502 = vmatpush2.msra.mxu0 0.0
        %503 = vmatprep.subr.mxu0 0.0
        %504 = vmatpush2.msra.mxu0 0.0
        %505 = vmatprep.subr.mxu0 0.0
        %506 = vmatpush2.msra.mxu0 0.0
        %507 = vmatprep.subr.mxu0 0.0
        %508 = vmatpush2.msra.mxu0 0.0
        %509 = vmatprep.subr.mxu0 0.0
        %510 = vmatpush2.msra.mxu0 0.0
        %511 = vmatprep.subr.mxu0 0.0
        %512 = vmatpush2.msra.mxu0 0.0
        %513 = vmatprep.mubr.f32.mxu0 0.0
        %514 = vmatmul.mubr.f32.gmra.mxu0 %v444
        %v515 = vpop.f32.mrf.mxu0
        %v516 = vadd.f32 0.0, %v515
        %v517 = vpop.f32.mrf.mxu0
        %518 = vmatprep.mubr.f32.mxu0 0.0
        %519 = vmatmul.mubr.f32.gmra.mxu0 %v447
        %v520 = vpop.f32.mrf.mxu0
        %v521 = vadd.f32 0.0, %v520
        %v522 = vpop.f32.mrf.mxu0
        %523 = vdwg.mxu0
        %v525 = vsel %vm280, %v270, 0
        %v528 = vsel %vm280, %v271, 0
        %530 = vmatprep.subr.mxu0 0.0
        %531 = vmatpush1.msra.mxu0 0.0
        %532 = vmatprep.subr.mxu0 0.0
        %533 = vmatpush1.msra.mxu0 0.0
        %534 = vmatprep.subr.mxu0 0.0
        %535 = vmatpush1.msra.mxu0 0.0
        %536 = vmatprep.subr.mxu0 0.0
        %537 = vmatpush1.msra.mxu0 0.0
        %538 = vmatprep.subr.mxu0 0.0
        %539 = vmatpush1.msra.mxu0 0.0
        %540 = vmatprep.subr.mxu0 0.0
        %541 = vmatpush1.msra.mxu0 0.0
        %542 = vmatprep.subr.mxu0 0.0
        %543 = vmatpush1.msra.mxu0 0.0
        %544 = vmatprep.subr.mxu0 0.0
        %545 = vmatpush1.msra.mxu0 0.0
        %546 = vmatprep.subr.mxu0 0.0
        %547 = vmatpush1.msra.mxu0 0.0
        %548 = vmatprep.subr.mxu0 0.0
        %549 = vmatpush1.msra.mxu0 0.0
        %550 = vmatprep.subr.mxu0 0.0
        %551 = vmatpush1.msra.mxu0 0.0
        %552 = vmatprep.subr.mxu0 0.0
        %553 = vmatpush1.msra.mxu0 0.0
        %554 = vmatprep.subr.mxu0 0.0
        %555 = vmatpush1.msra.mxu0 0.0
        %556 = vmatprep.subr.mxu0 0.0
        %557 = vmatpush1.msra.mxu0 0.0
        %558 = vmatprep.subr.mxu0 0.0
        %559 = vmatpush1.msra.mxu0 %v279
        %560 = vmatprep.subr.mxu0 0.0
        %561 = vmatpush1.msra.mxu0 %v278
        %562 = vmatprep.subr.mxu0 0.0
        %563 = vmatpush2.msra.mxu0 0.0
        %564 = vmatprep.subr.mxu0 0.0
        %565 = vmatpush2.msra.mxu0 0.0
        %566 = vmatprep.subr.mxu0 0.0
        %567 = vmatpush2.msra.mxu0 0.0
        %568 = vmatprep.subr.mxu0 0.0
        %569 = vmatpush2.msra.mxu0 0.0
        %570 = vmatprep.subr.mxu0 0.0
        %571 = vmatpush2.msra.mxu0 0.0
        %572 = vmatprep.subr.mxu0 0.0
        %573 = vmatpush2.msra.mxu0 0.0
        %574 = vmatprep.subr.mxu0 0.0
        %575 = vmatpush2.msra.mxu0 0.0
        %576 = vmatprep.subr.mxu0 0.0
        %577 = vmatpush2.msra.mxu0 0.0
        %578 = vmatprep.subr.mxu0 0.0
        %579 = vmatpush2.msra.mxu0 0.0
        %580 = vmatprep.subr.mxu0 0.0
        %581 = vmatpush2.msra.mxu0 0.0
        %582 = vmatprep.subr.mxu0 0.0
        %583 = vmatpush2.msra.mxu0 0.0
        %584 = vmatprep.subr.mxu0 0.0
        %585 = vmatpush2.msra.mxu0 0.0
        %586 = vmatprep.subr.mxu0 0.0
        %587 = vmatpush2.msra.mxu0 0.0
        %588 = vmatprep.subr.mxu0 0.0
        %589 = vmatpush2.msra.mxu0 0.0
        %590 = vmatprep.subr.mxu0 0.0
        %591 = vmatpush2.msra.mxu0 0.0
        %592 = vmatprep.subr.mxu0 0.0
        %593 = vmatpush2.msra.mxu0 0.0
        %594 = vmatprep.mubr.f32.mxu0 0.0
        %595 = vmatmul.mubr.f32.gmra.mxu0 %v525
        %v596 = vpop.f32.mrf.mxu0
        %v597 = vadd.f32 0.0, %v596
        %v598 = vpop.f32.mrf.mxu0
        %599 = vmatprep.mubr.f32.mxu0 0.0
        %600 = vmatmul.mubr.f32.gmra.mxu0 %v528
        %v601 = vpop.f32.mrf.mxu0
        %v602 = vadd.f32 0.0, %v601
        %v603 = vpop.f32.mrf.mxu0
        %604 = vdwg.mxu0
        %v605 = vld [vmem:[#allocation4] sm:$0xff]
        %v606 = vld [vmem:[#allocation4 + $0x8] sm:$0xff]
        %v607 = vld [vmem:[#allocation4 + $0x10] sm:$0xff]
        %v608 = vld [vmem:[#allocation4 + $0x18] sm:$0xff]
        %v609 = vld [vmem:[#allocation4 + $0x20] sm:$0xff]
        %v610 = vld [vmem:[#allocation4 + $0x28] sm:$0xff]
        %v611 = vld [vmem:[#allocation4 + $0x30] sm:$0xff]
        %v612 = vld [vmem:[#allocation4 + $0x38] sm:$0xff]
        %v614 = vsel %vm280, %v605, 0
        %v617 = vsel %vm280, %v606, 0
        %619 = vmatprep.subr.mxu0 0.0
        %620 = vmatpush1.msra.mxu0 0.0
        %621 = vmatprep.subr.mxu0 0.0
        %622 = vmatpush1.msra.mxu0 0.0
        %623 = vmatprep.subr.mxu0 0.0
        %624 = vmatpush1.msra.mxu0 0.0
        %625 = vmatprep.subr.mxu0 0.0
        %626 = vmatpush1.msra.mxu0 0.0
        %627 = vmatprep.subr.mxu0 0.0
        %628 = vmatpush1.msra.mxu0 0.0
        %629 = vmatprep.subr.mxu0 0.0
        %630 = vmatpush1.msra.mxu0 0.0
        %631 = vmatprep.subr.mxu0 0.0
        %632 = vmatpush1.msra.mxu0 0.0
        %633 = vmatprep.subr.mxu0 0.0
        %634 = vmatpush1.msra.mxu0 0.0
        %635 = vmatprep.subr.mxu0 0.0
        %636 = vmatpush1.msra.mxu0 0.0
        %637 = vmatprep.subr.mxu0 0.0
        %638 = vmatpush1.msra.mxu0 0.0
        %639 = vmatprep.subr.mxu0 0.0
        %640 = vmatpush1.msra.mxu0 0.0
        %641 = vmatprep.subr.mxu0 0.0
        %642 = vmatpush1.msra.mxu0 0.0
        %643 = vmatprep.subr.mxu0 0.0
        %644 = vmatpush1.msra.mxu0 0.0
        %645 = vmatprep.subr.mxu0 0.0
        %646 = vmatpush1.msra.mxu0 0.0
        %647 = vmatprep.subr.mxu0 0.0
        %648 = vmatpush1.msra.mxu0 %v359
        %649 = vmatprep.subr.mxu0 0.0
        %650 = vmatpush1.msra.mxu0 %v354
        %651 = vmatprep.subr.mxu0 0.0
        %652 = vmatpush2.msra.mxu0 0.0
        %653 = vmatprep.subr.mxu0 0.0
        %654 = vmatpush2.msra.mxu0 0.0
        %655 = vmatprep.subr.mxu0 0.0
        %656 = vmatpush2.msra.mxu0 0.0
        %657 = vmatprep.subr.mxu0 0.0
        %658 = vmatpush2.msra.mxu0 0.0
        %659 = vmatprep.subr.mxu0 0.0
        %660 = vmatpush2.msra.mxu0 0.0
        %661 = vmatprep.subr.mxu0 0.0
        %662 = vmatpush2.msra.mxu0 0.0
        %663 = vmatprep.subr.mxu0 0.0
        %664 = vmatpush2.msra.mxu0 0.0
        %665 = vmatprep.subr.mxu0 0.0
        %666 = vmatpush2.msra.mxu0 0.0
        %667 = vmatprep.subr.mxu0 0.0
        %668 = vmatpush2.msra.mxu0 0.0
        %669 = vmatprep.subr.mxu0 0.0
        %670 = vmatpush2.msra.mxu0 0.0
        %671 = vmatprep.subr.mxu0 0.0
        %672 = vmatpush2.msra.mxu0 0.0
        %673 = vmatprep.subr.mxu0 0.0
        %674 = vmatpush2.msra.mxu0 0.0
        %675 = vmatprep.subr.mxu0 0.0
        %676 = vmatpush2.msra.mxu0 0.0
        %677 = vmatprep.subr.mxu0 0.0
        %678 = vmatpush2.msra.mxu0 0.0
        %679 = vmatprep.subr.mxu0 0.0
        %680 = vmatpush2.msra.mxu0 0.0
        %681 = vmatprep.subr.mxu0 0.0
        %682 = vmatpush2.msra.mxu0 0.0
        %683 = vmatprep.mubr.f32.mxu0 0.0
        %684 = vmatmul.mubr.f32.gmra.mxu0 %v614
        %v685 = vpop.f32.mrf.mxu0
        %v686 = vadd.f32 0.0, %v685
        %v687 = vpop.f32.mrf.mxu0
        %688 = vmatprep.mubr.f32.mxu0 0.0
        %689 = vmatmul.mubr.f32.gmra.mxu0 %v617
        %v690 = vpop.f32.mrf.mxu0
        %v691 = vadd.f32 0.0, %v690
        %v692 = vpop.f32.mrf.mxu0
        %693 = vdwg.mxu0
        %v695 = vsel %vm280, %v607, 0
        %v698 = vsel %vm280, %v608, 0
        %700 = vmatprep.subr.mxu0 0.0
        %701 = vmatpush1.msra.mxu0 0.0
        %702 = vmatprep.subr.mxu0 0.0
        %703 = vmatpush1.msra.mxu0 0.0
        %704 = vmatprep.subr.mxu0 0.0
        %705 = vmatpush1.msra.mxu0 0.0
        %706 = vmatprep.subr.mxu0 0.0
        %707 = vmatpush1.msra.mxu0 0.0
        %708 = vmatprep.subr.mxu0 0.0
        %709 = vmatpush1.msra.mxu0 0.0
        %710 = vmatprep.subr.mxu0 0.0
        %711 = vmatpush1.msra.mxu0 0.0
        %712 = vmatprep.subr.mxu0 0.0
        %713 = vmatpush1.msra.mxu0 0.0
        %714 = vmatprep.subr.mxu0 0.0
        %715 = vmatpush1.msra.mxu0 0.0
        %716 = vmatprep.subr.mxu0 0.0
        %717 = vmatpush1.msra.mxu0 0.0
        %718 = vmatprep.subr.mxu0 0.0
        %719 = vmatpush1.msra.mxu0 0.0
        %720 = vmatprep.subr.mxu0 0.0
        %721 = vmatpush1.msra.mxu0 0.0
        %722 = vmatprep.subr.mxu0 0.0
        %723 = vmatpush1.msra.mxu0 0.0
        %724 = vmatprep.subr.mxu0 0.0
        %725 = vmatpush1.msra.mxu0 0.0
        %726 = vmatprep.subr.mxu0 0.0
        %727 = vmatpush1.msra.mxu0 0.0
        %728 = vmatprep.subr.mxu0 0.0
        %729 = vmatpush1.msra.mxu0 %v440
        %730 = vmatprep.subr.mxu0 0.0
        %731 = vmatpush1.msra.mxu0 %v435
        %732 = vmatprep.subr.mxu0 0.0
        %733 = vmatpush2.msra.mxu0 0.0
        %734 = vmatprep.subr.mxu0 0.0
        %735 = vmatpush2.msra.mxu0 0.0
        %736 = vmatprep.subr.mxu0 0.0
        %737 = vmatpush2.msra.mxu0 0.0
        %738 = vmatprep.subr.mxu0 0.0
        %739 = vmatpush2.msra.mxu0 0.0
        %740 = vmatprep.subr.mxu0 0.0
        %741 = vmatpush2.msra.mxu0 0.0
        %742 = vmatprep.subr.mxu0 0.0
        %743 = vmatpush2.msra.mxu0 0.0
        %744 = vmatprep.subr.mxu0 0.0
        %745 = vmatpush2.msra.mxu0 0.0
        %746 = vmatprep.subr.mxu0 0.0
        %747 = vmatpush2.msra.mxu0 0.0
        %748 = vmatprep.subr.mxu0 0.0
        %749 = vmatpush2.msra.mxu0 0.0
        %750 = vmatprep.subr.mxu0 0.0
        %751 = vmatpush2.msra.mxu0 0.0
        %752 = vmatprep.subr.mxu0 0.0
        %753 = vmatpush2.msra.mxu0 0.0
        %754 = vmatprep.subr.mxu0 0.0
        %755 = vmatpush2.msra.mxu0 0.0
        %756 = vmatprep.subr.mxu0 0.0
        %757 = vmatpush2.msra.mxu0 0.0
        %758 = vmatprep.subr.mxu0 0.0
        %759 = vmatpush2.msra.mxu0 0.0
        %760 = vmatprep.subr.mxu0 0.0
        %761 = vmatpush2.msra.mxu0 0.0
        %762 = vmatprep.subr.mxu0 0.0
        %763 = vmatpush2.msra.mxu0 0.0
        %764 = vmatprep.mubr.f32.mxu0 0.0
        %765 = vmatmul.mubr.f32.gmra.mxu0 %v695
        %v766 = vpop.f32.mrf.mxu0
        %v767 = vadd.f32 0.0, %v766
        %v768 = vpop.f32.mrf.mxu0
        %769 = vmatprep.mubr.f32.mxu0 0.0
        %770 = vmatmul.mubr.f32.gmra.mxu0 %v698
        %v771 = vpop.f32.mrf.mxu0
        %v772 = vadd.f32 0.0, %v771
        %v773 = vpop.f32.mrf.mxu0
        %774 = vdwg.mxu0
        %v776 = vsel %vm280, %v609, 0
        %v779 = vsel %vm280, %v610, 0
        %781 = vmatprep.subr.mxu0 0.0
        %782 = vmatpush1.msra.mxu0 0.0
        %783 = vmatprep.subr.mxu0 0.0
        %784 = vmatpush1.msra.mxu0 0.0
        %785 = vmatprep.subr.mxu0 0.0
        %786 = vmatpush1.msra.mxu0 0.0
        %787 = vmatprep.subr.mxu0 0.0
        %788 = vmatpush1.msra.mxu0 0.0
        %789 = vmatprep.subr.mxu0 0.0
        %790 = vmatpush1.msra.mxu0 0.0
        %791 = vmatprep.subr.mxu0 0.0
        %792 = vmatpush1.msra.mxu0 0.0
        %793 = vmatprep.subr.mxu0 0.0
        %794 = vmatpush1.msra.mxu0 0.0
        %795 = vmatprep.subr.mxu0 0.0
        %796 = vmatpush1.msra.mxu0 0.0
        %797 = vmatprep.subr.mxu0 0.0
        %798 = vmatpush1.msra.mxu0 0.0
        %799 = vmatprep.subr.mxu0 0.0
        %800 = vmatpush1.msra.mxu0 0.0
        %801 = vmatprep.subr.mxu0 0.0
        %802 = vmatpush1.msra.mxu0 0.0
        %803 = vmatprep.subr.mxu0 0.0
        %804 = vmatpush1.msra.mxu0 0.0
        %805 = vmatprep.subr.mxu0 0.0
        %806 = vmatpush1.msra.mxu0 0.0
        %807 = vmatprep.subr.mxu0 0.0
        %808 = vmatpush1.msra.mxu0 0.0
        %809 = vmatprep.subr.mxu0 0.0
        %810 = vmatpush1.msra.mxu0 %v521
        %811 = vmatprep.subr.mxu0 0.0
        %812 = vmatpush1.msra.mxu0 %v516
        %813 = vmatprep.subr.mxu0 0.0
        %814 = vmatpush2.msra.mxu0 0.0
        %815 = vmatprep.subr.mxu0 0.0
        %816 = vmatpush2.msra.mxu0 0.0
        %817 = vmatprep.subr.mxu0 0.0
        %818 = vmatpush2.msra.mxu0 0.0
        %819 = vmatprep.subr.mxu0 0.0
        %820 = vmatpush2.msra.mxu0 0.0
        %821 = vmatprep.subr.mxu0 0.0
        %822 = vmatpush2.msra.mxu0 0.0
        %823 = vmatprep.subr.mxu0 0.0
        %824 = vmatpush2.msra.mxu0 0.0
        %825 = vmatprep.subr.mxu0 0.0
        %826 = vmatpush2.msra.mxu0 0.0
        %827 = vmatprep.subr.mxu0 0.0
        %828 = vmatpush2.msra.mxu0 0.0
        %829 = vmatprep.subr.mxu0 0.0
        %830 = vmatpush2.msra.mxu0 0.0
        %831 = vmatprep.subr.mxu0 0.0
        %832 = vmatpush2.msra.mxu0 0.0
        %833 = vmatprep.subr.mxu0 0.0
        %834 = vmatpush2.msra.mxu0 0.0
        %835 = vmatprep.subr.mxu0 0.0
        %836 = vmatpush2.msra.mxu0 0.0
        %837 = vmatprep.subr.mxu0 0.0
        %838 = vmatpush2.msra.mxu0 0.0
        %839 = vmatprep.subr.mxu0 0.0
        %840 = vmatpush2.msra.mxu0 0.0
        %841 = vmatprep.subr.mxu0 0.0
        %842 = vmatpush2.msra.mxu0 0.0
        %843 = vmatprep.subr.mxu0 0.0
        %844 = vmatpush2.msra.mxu0 0.0
        %845 = vmatprep.mubr.f32.mxu0 0.0
        %846 = vmatmul.mubr.f32.gmra.mxu0 %v776
        %v847 = vpop.f32.mrf.mxu0
        %v848 = vadd.f32 0.0, %v847
        %v849 = vpop.f32.mrf.mxu0
        %850 = vmatprep.mubr.f32.mxu0 0.0
        %851 = vmatmul.mubr.f32.gmra.mxu0 %v779
        %v852 = vpop.f32.mrf.mxu0
        %v853 = vadd.f32 0.0, %v852
        %v854 = vpop.f32.mrf.mxu0
        %855 = vdwg.mxu0
        %v857 = vsel %vm280, %v611, 0
        %v860 = vsel %vm280, %v612, 0
        %862 = vmatprep.subr.mxu0 0.0
        %863 = vmatpush1.msra.mxu0 0.0
        %864 = vmatprep.subr.mxu0 0.0
        %865 = vmatpush1.msra.mxu0 0.0
        %866 = vmatprep.subr.mxu0 0.0
        %867 = vmatpush1.msra.mxu0 0.0
        %868 = vmatprep.subr.mxu0 0.0
        %869 = vmatpush1.msra.mxu0 0.0
        %870 = vmatprep.subr.mxu0 0.0
        %871 = vmatpush1.msra.mxu0 0.0
        %872 = vmatprep.subr.mxu0 0.0
        %873 = vmatpush1.msra.mxu0 0.0
        %874 = vmatprep.subr.mxu0 0.0
        %875 = vmatpush1.msra.mxu0 0.0
        %876 = vmatprep.subr.mxu0 0.0
        %877 = vmatpush1.msra.mxu0 0.0
        %878 = vmatprep.subr.mxu0 0.0
        %879 = vmatpush1.msra.mxu0 0.0
        %880 = vmatprep.subr.mxu0 0.0
        %881 = vmatpush1.msra.mxu0 0.0
        %882 = vmatprep.subr.mxu0 0.0
        %883 = vmatpush1.msra.mxu0 0.0
        %884 = vmatprep.subr.mxu0 0.0
        %885 = vmatpush1.msra.mxu0 0.0
        %886 = vmatprep.subr.mxu0 0.0
        %887 = vmatpush1.msra.mxu0 0.0
        %888 = vmatprep.subr.mxu0 0.0
        %889 = vmatpush1.msra.mxu0 0.0
        %890 = vmatprep.subr.mxu0 0.0
        %891 = vmatpush1.msra.mxu0 %v602
        %892 = vmatprep.subr.mxu0 0.0
        %893 = vmatpush1.msra.mxu0 %v597
        %894 = vmatprep.subr.mxu0 0.0
        %895 = vmatpush2.msra.mxu0 0.0
        %896 = vmatprep.subr.mxu0 0.0
        %897 = vmatpush2.msra.mxu0 0.0
        %898 = vmatprep.subr.mxu0 0.0
        %899 = vmatpush2.msra.mxu0 0.0
        %900 = vmatprep.subr.mxu0 0.0
        %901 = vmatpush2.msra.mxu0 0.0
        %902 = vmatprep.subr.mxu0 0.0
        %903 = vmatpush2.msra.mxu0 0.0
        %904 = vmatprep.subr.mxu0 0.0
        %905 = vmatpush2.msra.mxu0 0.0
        %906 = vmatprep.subr.mxu0 0.0
        %907 = vmatpush2.msra.mxu0 0.0
        %908 = vmatprep.subr.mxu0 0.0
        %909 = vmatpush2.msra.mxu0 0.0
        %910 = vmatprep.subr.mxu0 0.0
        %911 = vmatpush2.msra.mxu0 0.0
        %912 = vmatprep.subr.mxu0 0.0
        %913 = vmatpush2.msra.mxu0 0.0
        %914 = vmatprep.subr.mxu0 0.0
        %915 = vmatpush2.msra.mxu0 0.0
        %916 = vmatprep.subr.mxu0 0.0
        %917 = vmatpush2.msra.mxu0 0.0
        %918 = vmatprep.subr.mxu0 0.0
        %919 = vmatpush2.msra.mxu0 0.0
        %920 = vmatprep.subr.mxu0 0.0
        %921 = vmatpush2.msra.mxu0 0.0
        %922 = vmatprep.subr.mxu0 0.0
        %923 = vmatpush2.msra.mxu0 0.0
        %924 = vmatprep.subr.mxu0 0.0
        %925 = vmatpush2.msra.mxu0 0.0
        %926 = vmatprep.mubr.f32.mxu0 0.0
        %927 = vmatmul.mubr.f32.gmra.mxu0 %v857
        %v928 = vpop.f32.mrf.mxu0
        %v929 = vadd.f32 0.0, %v928
        %v930 = vpop.f32.mrf.mxu0
        %931 = vmatprep.mubr.f32.mxu0 0.0
        %932 = vmatmul.mubr.f32.gmra.mxu0 %v860
        %v933 = vpop.f32.mrf.mxu0
        %v934 = vadd.f32 0.0, %v933
        %v935 = vpop.f32.mrf.mxu0
        %936 = vdwg.mxu0
        %v937 = vld [vmem:[%s257] sm:$0x1]
        %v938 = vld [vmem:[%s257 + $0x1] sm:$0x1]
        %v939 = vld [vmem:[%s257 + $0x2] sm:$0x1]
        %v940 = vld [vmem:[%s257 + $0x3] sm:$0x1]
        %v941 = vsel %vm280, %v686, -inf
        %942 = vmax.xlane.f32.xlu0 %v941
        %v943 = vpop.xlane.xlu0 %942
        %v944 = vsel %vm280, %v691, -inf
        %945 = vmax.xlane.f32.xlu0 %v944
        %v946 = vpop.xlane.xlu0 %945
        %v947 = vsel %vm280, %v767, -inf
        %948 = vmax.xlane.f32.xlu0 %v947
        %v949 = vpop.xlane.xlu0 %948
        %v950 = vsel %vm280, %v772, -inf
        %951 = vmax.xlane.f32.xlu0 %v950
        %v952 = vpop.xlane.xlu0 %951
        %v953 = vsel %vm280, %v848, -inf
        %954 = vmax.xlane.f32.xlu0 %v953
        %v955 = vpop.xlane.xlu0 %954
        %v956 = vsel %vm280, %v853, -inf
        %957 = vmax.xlane.f32.xlu0 %v956
        %v958 = vpop.xlane.xlu0 %957
        %v959 = vsel %vm280, %v929, -inf
        %960 = vmax.xlane.f32.xlu0 %v959
        %v961 = vpop.xlane.xlu0 %960
        %v962 = vsel %vm280, %v934, -inf
        %963 = vmax.xlane.f32.xlu0 %v962
        %v964 = vpop.xlane.xlu0 %963
        %v965 = vmax.f32 %v943, %v946
        %v966 = vrot.slane %v965, 4
        %v967 = vmax.f32 %v965, %v966
        %v968 = vrot.slane %v967, 2
        %v969 = vmax.f32 %v967, %v968
        %v970 = vrot.slane %v969, 1
        %v971 = vmax.f32 %v969, %v970
        %v972 = vmax.f32 %v949, %v952
        %v973 = vrot.slane %v972, 4
        %v974 = vmax.f32 %v972, %v973
        %v975 = vrot.slane %v974, 2
        %v976 = vmax.f32 %v974, %v975
        %v977 = vrot.slane %v976, 1
        %v978 = vmax.f32 %v976, %v977
        %v979 = vmax.f32 %v955, %v958
        %v980 = vrot.slane %v979, 4
        %v981 = vmax.f32 %v979, %v980
        %v982 = vrot.slane %v981, 2
        %v983 = vmax.f32 %v981, %v982
        %v984 = vrot.slane %v983, 1
        %v985 = vmax.f32 %v983, %v984
        %v986 = vmax.f32 %v961, %v964
        %v987 = vrot.slane %v986, 4
        %v988 = vmax.f32 %v986, %v987
        %v989 = vrot.slane %v988, 2
        %v990 = vmax.f32 %v988, %v989
        %v991 = vrot.slane %v990, 1
        %v992 = vmax.f32 %v990, %v991
        %v993 = vsub.f32 %v686, %v971
        %v994 = vsub.f32 %v691, %v971
        %v995 = vsub.f32 %v767, %v978
        %v996 = vsub.f32 %v772, %v978
        %v997 = vsub.f32 %v848, %v985
        %v998 = vsub.f32 %v853, %v985
        %v999 = vsub.f32 %v929, %v992
        %v1000 = vsub.f32 %v934, %v992
        %v1005 = vlaneseq
        %v1006 = vshrl.u32 %v1005, 7
        %v1007 = vsub.s32 0, %v1006
        %v1008 = vrot.slane %v937, %v1007
        %v1009 = vlaneseq
        %v1010 = vshrl.u32 %v1009, 7
        %v1011 = vsub.s32 0, %v1010
        %v1012 = vrot.slane %v938, %v1011
        %v1013 = vlaneseq
        %v1014 = vshrl.u32 %v1013, 7
        %v1015 = vsub.s32 0, %v1014
        %v1016 = vrot.slane %v939, %v1015
        %v1017 = vlaneseq
        %v1018 = vshrl.u32 %v1017, 7
        %v1019 = vsub.s32 0, %v1018
        %v1020 = vrot.slane %v940, %v1019
        %1021 = vset.pattern.permute.xlu0 0
        %1022 = vperm.xlu0 %1021, %v1008
        %v1023 = vpop.permute.xlu0 %1022
        %1025 = vset.pattern.permute.xlu0 0
        %1026 = vperm.xlu0 %1025, %v1012
        %v1027 = vpop.permute.xlu0 %1026
        %1029 = vset.pattern.permute.xlu0 0
        %1030 = vperm.xlu0 %1029, %v1016
        %v1031 = vpop.permute.xlu0 %1030
        %1033 = vset.pattern.permute.xlu0 0
        %1034 = vperm.xlu0 %1033, %v1020
        %v1035 = vpop.permute.xlu0 %1034
        %v1037 = vmul.f32 %v1023, %v993
        %v1038 = vmul.f32 %v1023, %v994
        %v1039 = vmul.f32 %v1027, %v995
        %v1040 = vmul.f32 %v1027, %v996
        %v1041 = vmul.f32 %v1031, %v997
        %v1042 = vmul.f32 %v1031, %v998
        %v1043 = vmul.f32 %v1035, %v999
        %v1044 = vmul.f32 %v1035, %v1000
        %v1045 = vmul.f32 %v1037, 1.442695
        %v1046 = vpow.pop %v1045
        %v1047 = vmul.f32 %v1038, 1.442695
        %v1048 = vpow.pop %v1047
        %v1049 = vmul.f32 %v1039, 1.442695
        %v1050 = vpow.pop %v1049
        %v1051 = vmul.f32 %v1040, 1.442695
        %v1052 = vpow.pop %v1051
        %v1053 = vmul.f32 %v1041, 1.442695
        %v1054 = vpow.pop %v1053
        %v1055 = vmul.f32 %v1042, 1.442695
        %v1056 = vpow.pop %v1055
        %v1057 = vmul.f32 %v1043, 1.442695
        %v1058 = vpow.pop %v1057
        %v1059 = vmul.f32 %v1044, 1.442695
        %v1060 = vpow.pop %v1059
        %v1061 = vsel %vm280, %v1046, 0.0
        %v1062 = vsel %vm280, %v1048, 0.0
        %v1063 = vadd.f32 %v1061, %v1062
        %v1064 = vrot.slane %v1063, 4
        %v1065 = vadd.f32 %v1063, %v1064
        %v1066 = vrot.slane %v1065, 2
        %v1067 = vadd.f32 %v1065, %v1066
        %v1068 = vrot.slane %v1067, 1
        %v1069 = vadd.f32 %v1067, %v1068
        %v1070 = vsel %vm280, %v1050, 0.0
        %v1071 = vsel %vm280, %v1052, 0.0
        %v1072 = vadd.f32 %v1070, %v1071
        %v1073 = vrot.slane %v1072, 4
        %v1074 = vadd.f32 %v1072, %v1073
        %v1075 = vrot.slane %v1074, 2
        %v1076 = vadd.f32 %v1074, %v1075
        %v1077 = vrot.slane %v1076, 1
        %v1078 = vadd.f32 %v1076, %v1077
        %v1079 = vsel %vm280, %v1054, 0.0
        %v1080 = vsel %vm280, %v1056, 0.0
        %v1081 = vadd.f32 %v1079, %v1080
        %v1082 = vrot.slane %v1081, 4
        %v1083 = vadd.f32 %v1081, %v1082
        %v1084 = vrot.slane %v1083, 2
        %v1085 = vadd.f32 %v1083, %v1084
        %v1086 = vrot.slane %v1085, 1
        %v1087 = vadd.f32 %v1085, %v1086
        %v1088 = vsel %vm280, %v1058, 0.0
        %v1089 = vsel %vm280, %v1060, 0.0
        %v1090 = vadd.f32 %v1088, %v1089
        %v1091 = vrot.slane %v1090, 4
        %v1092 = vadd.f32 %v1090, %v1091
        %v1093 = vrot.slane %v1092, 2
        %v1094 = vadd.f32 %v1092, %v1093
        %v1095 = vrot.slane %v1094, 1
        %v1096 = vadd.f32 %v1094, %v1095
        %1097 = vadd.xlane.f32.xlu0 %v1061
        %v1098 = vpop.xlane.xlu0 %1097
        %1099 = vadd.xlane.f32.xlu0 %v1062
        %v1100 = vpop.xlane.xlu0 %1099
        %1101 = vadd.xlane.f32.xlu0 %v1070
        %v1102 = vpop.xlane.xlu0 %1101
        %1103 = vadd.xlane.f32.xlu0 %v1071
        %v1104 = vpop.xlane.xlu0 %1103
        %1105 = vadd.xlane.f32.xlu0 %v1079
        %v1106 = vpop.xlane.xlu0 %1105
        %1107 = vadd.xlane.f32.xlu0 %v1080
        %v1108 = vpop.xlane.xlu0 %1107
        %1109 = vadd.xlane.f32.xlu0 %v1088
        %v1110 = vpop.xlane.xlu0 %1109
        %1111 = vadd.xlane.f32.xlu0 %v1089
        %v1112 = vpop.xlane.xlu0 %1111
        %vm1117 = vcmask 1041409
        %v1118 = vsel %vm1117, %v1078, %v1069
        %vm1119 = vcmask 1042434
        %v1120 = vsel %vm1119, %v1087, %v1118
        %vm1121 = vcmask 1043459
        %v1122 = vsel %vm1121, %v1096, %v1120
        %vm1124 = vcmask 125952
        %v1125 = vsel %vm1124, %v1122, 0.0
        %1126 = vadd.xlane.f32.xlu0 %v1125
        %v1127 = vpop.xlane.xlu0 %1126
        %v1128 = vlaneseq
        %v1129 = vand.u32 %v1128, 127
        %v1130 = vcvt.s32.f32 %v1129
        %v1131 = vmul.f32 %v1069, %v1130
        %v1132 = vmul.f32 %v1078, %v1130
        %v1133 = vmul.f32 %v1087, %v1130
        %v1134 = vmul.f32 %v1096, %v1130
        %v1139 = vrot.slane %v1132, 7
        %v1140 = vsel %vm1117, %v1139, %v1131
        %v1141 = vrot.slane %v1133, 6
        %v1142 = vsel %vm1119, %v1141, %v1140
        %v1143 = vrot.slane %v1134, 5
        %v1144 = vsel %vm1121, %v1143, %v1142
        %v1146 = vsel %vm1124, %v1144, 0.0
        %1147 = vadd.xlane.f32.xlu0 %v1146
        %v1148 = vpop.xlane.xlu0 %1147
        %1151 = vbcast.lane.b32.xlu0 %v1130, 256
        %v1152 = vpop.permute.xlu0 %1151
        %s1154 = sor.u32 256, 8
        %1155 = vbcast.lane.b32.xlu0 %v1130, %s1154
        %v1156 = vpop.permute.xlu0 %1155
        %v1159 = vmul.f32 %v1098, %v1152
        %v1160 = vmul.f32 %v1100, %v1156
        %v1161 = vmul.f32 %v1102, %v1152
        %v1162 = vmul.f32 %v1104, %v1156
        %v1163 = vmul.f32 %v1106, %v1152
        %v1164 = vmul.f32 %v1108, %v1156
        %v1165 = vmul.f32 %v1110, %v1152
        %v1166 = vmul.f32 %v1112, %v1156
        %1175 = vset.pattern.permute.xlu0 0
        %1176 = vperm.xlu0 %1175, %v1159
        %v1177 = vpop.permute.xlu0 %1176
        %1178 = vset.pattern.permute.xlu0 0
        %1179 = vperm.xlu0 %1178, %v1160
        %v1180 = vpop.permute.xlu0 %1179
        %1181 = vset.pattern.permute.xlu0 0
        %1182 = vperm.xlu0 %1181, %v1161
        %v1183 = vpop.permute.xlu0 %1182
        %1184 = vset.pattern.permute.xlu0 0
        %1185 = vperm.xlu0 %1184, %v1162
        %v1186 = vpop.permute.xlu0 %1185
        %1187 = vset.pattern.permute.xlu0 0
        %1188 = vperm.xlu0 %1187, %v1163
        %v1189 = vpop.permute.xlu0 %1188
        %1190 = vset.pattern.permute.xlu0 0
        %1191 = vperm.xlu0 %1190, %v1164
        %v1192 = vpop.permute.xlu0 %1191
        %1193 = vset.pattern.permute.xlu0 0
        %1194 = vperm.xlu0 %1193, %v1165
        %v1195 = vpop.permute.xlu0 %1194
        %1196 = vset.pattern.permute.xlu0 0
        %1197 = vperm.xlu0 %1196, %v1166
        %v1198 = vpop.permute.xlu0 %1197
        %v1199 = vlaneseq
        %v1200 = vshrl.u32 %v1199, 7
        %v1201 = vsub.s32 %v1129, %v1200
        %v1202 = vrot.slane %v1177, %v1201
        %v1203 = vadd.s32 %v1129, 4294967288
        %v1204 = vlaneseq
        %v1205 = vshrl.u32 %v1204, 7
        %v1206 = vsub.s32 %v1203, %v1205
        %v1207 = vrot.slane %v1180, %v1206
        %vm1208 = vcmask 130112
        %v1209 = vsel %vm1208, %v1207, %v1202
        %v1210 = vlaneseq
        %v1211 = vshrl.u32 %v1210, 7
        %v1212 = vsub.s32 %v1129, %v1211
        %v1213 = vrot.slane %v1183, %v1212
        %v1214 = vlaneseq
        %v1215 = vshrl.u32 %v1214, 7
        %v1216 = vsub.s32 %v1203, %v1215
        %v1217 = vrot.slane %v1186, %v1216
        %v1218 = vsel %vm1208, %v1217, %v1213
        %v1219 = vlaneseq
        %v1220 = vshrl.u32 %v1219, 7
        %v1221 = vsub.s32 %v1129, %v1220
        %v1222 = vrot.slane %v1189, %v1221
        %v1223 = vlaneseq
        %v1224 = vshrl.u32 %v1223, 7
        %v1225 = vsub.s32 %v1203, %v1224
        %v1226 = vrot.slane %v1192, %v1225
        %v1227 = vsel %vm1208, %v1226, %v1222
        %v1228 = vlaneseq
        %v1229 = vshrl.u32 %v1228, 7
        %v1230 = vsub.s32 %v1129, %v1229
        %v1231 = vrot.slane %v1195, %v1230
        %v1232 = vlaneseq
        %v1233 = vshrl.u32 %v1232, 7
        %v1234 = vsub.s32 %v1203, %v1233
        %v1235 = vrot.slane %v1198, %v1234
        %v1236 = vsel %vm1208, %v1235, %v1231
        %v1237 = vsel %vm1117, %v1218, %v1209
        %v1238 = vsel %vm1119, %v1227, %v1237
        %v1239 = vsel %vm1121, %v1236, %v1238
        %v1241 = vsel %vm1124, %v1239, 0.0
        %1242 = vadd.xlane.f32.xlu0 %v1241
        %v1243 = vpop.xlane.xlu0 %1242
        %v1244 = vadd.f32 %v1127, 1e-08
        %v1245 = vrcp.pop %v1244
        %v1246 = vmul.f32 1.0, %v1245
        %vm1247 = vcmask 7168
        %v1248 = vsel %vm1247, %v1148, %v1243
        %v1249 = vmul.f32 %v1248, %v1246
        %vm1250 = vcmask 11264
        %1251 = vst.msk [vmem:[%s263] sm:$0xf] %vm1250, %v1249
        %p1252 = scmp.lt.s32.totalorder %s17, 1
        %s1253 = scalar_select %p1252, %s17, 1
        %s1254 = smul.addr %s1253, 4
        %s1255 = scalar_lea.vmem %s4, %s1254
        // Predicated region
        $region49: #{tpu_custom_call.1} parent=35 // pred_check
          %p1256 = pneg %p129
        $region50: #{tpu_custom_call.1} parent=35 // pred_check_branch
          %1258 = sbr.rel (%p1256) target = $region52
        $region51: #{tpu_custom_call.1} parent=35 // pred_region
          _
        $region52: #{tpu_custom_call.1} parent=35 // pred_fallthru
          _
      $region36: #{tpu_custom_call.1} parent=5 // pred_fallthru
        _
      %p1259 = scmp.le.s32.totalorder 2, %s12
      // Predicated region
      $region53: #{tpu_custom_call.1} parent=5 // pred_check
        %p1260 = pneg %p1259
      $region54: #{tpu_custom_call.1} parent=5 // pred_check_branch
        %1262 = sbr.rel (%p1260) target = $region56
      $region55: #{tpu_custom_call.1} parent=5 // pred_region
        %s1263 = ssub.s32 %s12, 2
        // Predicated region
        $region57: #{tpu_custom_call.1} parent=55 // pred_check
          %p1264 = pneg %p135
        $region58: #{tpu_custom_call.1} parent=55 // pred_check_branch
          %1266 = sbr.rel (%p1264) target = $region60
        $region59: #{tpu_custom_call.1} parent=55 // pred_region
          %p1267 = scmp.lt.s32.totalorder %s18, 1
          %s1268 = scalar_select %p1267, %s18, 1
          %s1269 = smul.addr %s1268, 4
          %s1270 = scalar_lea.vmem %s4, %s1269
        $region60: #{tpu_custom_call.1} parent=55 // pred_fallthru
          _
      $region56: #{tpu_custom_call.1} parent=5 // pred_fallthru
        _
    $region6: #{tpu_custom_call.1} parent=1 // loop_footer
      %s16 = sadd.s32 1, %s12
    $region7: #{tpu_custom_call.1} parent=1 // loop_footer_branch
      %11 = sbr.rel target = $region3
    $region8: #{tpu_custom_call.1} parent=1 // loop_exit
      _
    %1271 = vsyncpa [#allocation3], 1
    %s1272 = scalar_lea.sflag [#allocation3], 1
    %1273 = vsyncpa %s1272, 1
    %1274 = vsyncpa [#allocation5], 1

</llo_original>
